<compile_context>
chip_gen: v6e
topology: v6e:2x2x1
jax: 0.10.0
libtpu: 0.0.40
codegen_flags: <defaults>
</compile_context>

<pallas_src>
import math
import functools

import jax
import jax.numpy as jnp
from jax import lax
from jax.experimental import pallas as pl
from jax.experimental.pallas import tpu as pltpu


# Large finite mask value (like the reference flash kernels) — avoids inf-inf
# NaNs and makes fully-masked rows self-correcting in the online softmax.
_MASK_VALUE = -0.7 * float(jnp.finfo(jnp.float32).max)


def _flash_kernel(q_ref, k_ref, v_ref, o_ref, m_sc, l_sc, acc_sc, *,
                  scale, is_causal, tq, tk):
    qi = pl.program_id(1)
    ki = pl.program_id(2)
    n_kv = pl.num_programs(2)

    @pl.when(ki == 0)
    def _init():
        m_sc[...] = jnp.full_like(m_sc, _MASK_VALUE)
        l_sc[...] = jnp.zeros_like(l_sc)
        acc_sc[...] = jnp.zeros_like(acc_sc)

    def _compute():
        # Fold 1/sqrt(Dh) into Q: tq*Dh multiplies instead of tq*tk.
        q = q_ref[0] * scale                       # (tq, Dh), input dtype
        k = k_ref[0]                               # (tk, Dh)
        v = v_ref[0]                               # (tk, Dh)

        # QK^T without materializing K^T: contract last dims on the MXU,
        # accumulate in f32.
        s = lax.dot_general(q, k, (((1,), (1,)), ((), ())),
                            preferred_element_type=jnp.float32)  # (tq, tk)

        if is_causal:
            q_pos = qi * tq + lax.broadcasted_iota(jnp.int32, s.shape, 0)
            k_pos = ki * tk + lax.broadcasted_iota(jnp.int32, s.shape, 1)
            s = jnp.where(q_pos >= k_pos, s, _MASK_VALUE)

        # Online softmax update (f32 statistics).
        m_prev = m_sc[...]                                        # (tq, 1)
        m_next = jnp.maximum(m_prev, jnp.max(s, axis=-1, keepdims=True))
        alpha = jnp.exp(m_prev - m_next)
        p = jnp.exp(s - m_next)                                   # (tq, tk) f32

        l_sc[...] = alpha * l_sc[...] + jnp.sum(p, axis=-1, keepdims=True)
        acc_sc[...] = alpha * acc_sc[...] + jnp.dot(
            p.astype(v.dtype), v, preferred_element_type=jnp.float32)
        m_sc[...] = m_next

    if is_causal:
        # Skip KV tiles that lie entirely above the diagonal for this Q tile.
        pl.when(ki * tk <= (qi + 1) * tq - 1)(_compute)
    else:
        _compute()

    @pl.when(ki == n_kv - 1)
    def _finalize():
        inv_l = pl.reciprocal(l_sc[...], approx=True)   # EUP slot, ~free
        o_ref[0] = (acc_sc[...] * inv_l).astype(o_ref.dtype)


def _pick_tile(n, candidates):
    for c in candidates:
        if n >= c and n % c == 0:
            return c
    return n  # fall back to the full (un-tiled) extent


def _sdpa_pallas(q_bh, k_bh, v_bh, *, is_causal):
    """q_bh: (BH, Sq, Dh), k_bh/v_bh: (BH, Sk, Dh) -> (BH, Sq, Dh)."""
    BH, Sq, Dh = q_bh.shape
    _, Sk, _ = k_bh.shape
    scale = 1.0 / math.sqrt(Dh)

    tq = _pick_tile(Sq, (256, 128))
    tk = _pick_tile(Sk, (512, 256, 128))
    n_q, n_kv = Sq // tq, Sk // tk

    kernel = functools.partial(_flash_kernel, scale=scale,
                               is_causal=is_causal, tq=tq, tk=tk)

    if is_causal:
        # Clamp the KV block index so pruned (fully-masked) tiles re-use the
        # previously fetched block -> Pallas skips their HBM DMA.
        def kv_map(b, qi, ki):
            return (b, jnp.minimum(ki, ((qi + 1) * tq - 1) // tk), 0)
    else:
        def kv_map(b, qi, ki):
            return (b, ki, 0)

    itemsize = jnp.dtype(q_bh.dtype).itemsize
    cost = pl.CostEstimate(
        flops=4 * BH * Sq * Sk * Dh,
        transcendentals=BH * Sq * Sk,
        bytes_accessed=itemsize * (q_bh.size + k_bh.size + v_bh.size
                                   + BH * Sq * Dh),
    )

    return pl.pallas_call(
        kernel,
        out_shape=jax.ShapeDtypeStruct((BH, Sq, Dh), q_bh.dtype),
        grid_spec=pltpu.PrefetchScalarGridSpec(
            num_scalar_prefetch=0,
            grid=(BH, n_q, n_kv),
            in_specs=[
                pl.BlockSpec((1, tq, Dh), lambda b, qi, ki: (b, qi, 0)),
                pl.BlockSpec((1, tk, Dh), kv_map),
                pl.BlockSpec((1, tk, Dh), kv_map),
            ],
            out_specs=pl.BlockSpec((1, tq, Dh), lambda b, qi, ki: (b, qi, 0)),
            scratch_shapes=[
                pltpu.VMEM((tq, 1), jnp.float32),    # m (running max)
                pltpu.VMEM((tq, 1), jnp.float32),    # l (running denom)
                pltpu.VMEM((tq, Dh), jnp.float32),   # acc
            ],
        ),
        compiler_params=pltpu.CompilerParams(
            dimension_semantics=("parallel", "parallel", "arbitrary"),
            vmem_limit_bytes=32 * 1024 * 1024,
        ),
        cost_estimate=cost,
    )(q_bh, k_bh, v_bh)


class ScaledDotProductAttention:
    """JAX/Pallas port of refiners' ScaledDotProductAttention (no parameters)."""

    def __init__(self, num_heads: int = 1, is_causal=None,
                 is_optimized: bool = True, slice_size=None):
        self.num_heads = num_heads
        self.is_causal = is_causal
        self.is_optimized = is_optimized  # both paths share the same kernel
        self.slice_size = slice_size

    # --- head split / merge (glue, plain JAX; matches the PyTorch module) ---
    def split_to_multi_head(self, x):
        b, s, e = x.shape
        assert e % self.num_heads == 0
        return jnp.transpose(
            x.reshape(b, s, self.num_heads, e // self.num_heads), (0, 2, 1, 3))

    def merge_multi_head(self, x):
        b, h, s, d = x.shape
        return jnp.transpose(x, (0, 2, 1, 3)).reshape(b, s, h * d)

    def _process_attention(self, query, key, value, is_causal=None):
        causal = (is_causal if is_causal is not None
                  else self.is_causal if self.is_causal is not None
                  else False)
        q = self.split_to_multi_head(query)   # (B, H, Sq, Dh)
        k = self.split_to_multi_head(key)
        v = self.split_to_multi_head(value)
        B, H, Sq, Dh = q.shape
        Sk = k.shape[2]
        out_bh = _sdpa_pallas(
            q.reshape(B * H, Sq, Dh),
            k.reshape(B * H, Sk, Dh),
            v.reshape(B * H, Sk, Dh),
            is_causal=causal,
        )
        return self.merge_multi_head(out_bh.reshape(B, H, Sq, Dh))

    def __call__(self, query, key, value, is_causal=None):
        # slice_size only bounded peak memory in the PyTorch module; the
        # flash-tiled kernel already bounds VMEM to O(tq*tk), so the sliced
        # path is routed through the same single pallas_call (attention rows
        # are independent, so the result is identical; causal masking uses
        # global query positions, fixing the per-slice mask-offset issue of a
        # per-slice python loop).
        return self._process_attention(query, key, value, is_causal)


def _reference_attention(query, key, value, num_heads, is_causal=False):
    """Pure-JAX reference mirroring the PyTorch module's math."""
    b, sq, e = query.shape
    sk = key.shape[1]
    d = e // num_heads
    q = jnp.transpose(query.reshape(b, sq, num_heads, d), (0, 2, 1, 3))
    k = jnp.transpose(key.reshape(b, sk, num_heads, d), (0, 2, 1, 3))
    v = jnp.transpose(value.reshape(b, sk, num_heads, d), (0, 2, 1, 3))
    s = jnp.einsum("bhqd,bhkd->bhqk", q, k) / math.sqrt(d)
    if is_causal:
        mask = jnp.tril(jnp.ones((sq, sk), dtype=bool))
        s = jnp.where(mask, s, -jnp.inf)
    p = jax.nn.softmax(s, axis=-1)
    o = jnp.einsum("bhqk,bhkd->bhqd", p, v)
    return jnp.transpose(o, (0, 2, 1, 3)).reshape(b, sq, num_heads * d)


if __name__ == "__main__":
    key0 = jax.random.PRNGKey(0)
    kq, kk, kv = jax.random.split(key0, 3)

    batch, seq, embed_dim, num_heads = 2, 8, 32, 4
    query = jax.random.normal(kq, (batch, seq, embed_dim), dtype=jnp.float32)
    key_t = jax.random.normal(kk, (batch, seq, embed_dim), dtype=jnp.float32)
    value = jax.random.normal(kv, (batch, seq, embed_dim), dtype=jnp.float32)

    # non-causal
    attn = ScaledDotProductAttention(num_heads=num_heads)
    out = jax.block_until_ready(attn(query, key_t, value))
    ref = _reference_attention(query, key_t, value, num_heads, is_causal=False)
    assert out.shape == (batch, seq, embed_dim)
    assert jnp.allclose(out, ref, atol=2e-3, rtol=2e-3), \
        float(jnp.max(jnp.abs(out - ref)))

    # causal
    attn_c = ScaledDotProductAttention(num_heads=num_heads, is_causal=True)
    out_c = jax.block_until_ready(attn_c(query, key_t, value))
    ref_c = _reference_attention(query, key_t, value, num_heads, is_causal=True)
    assert jnp.allclose(out_c, ref_c, atol=2e-3, rtol=2e-3), \
        float(jnp.max(jnp.abs(out_c - ref_c)))

    # sliced path (routed through the same tiled kernel)
    attn_s = ScaledDotProductAttention(num_heads=num_heads, slice_size=4)
    out_s = jax.block_until_ready(attn_s(query, key_t, value))
    assert jnp.allclose(out_s, ref, atol=2e-3, rtol=2e-3)

    print("KERNEL_OK")
</pallas_src>

<mosaic_0001>
module attributes {stable_mosaic.version = 11 : i64} {
  func.func @_flash_kernel(%arg0: i32, %arg1: i32, %arg2: i32, %arg3: memref<1x8x8xf32, #tpu.memory_space<vmem>>, %arg4: memref<1x8x8xf32, #tpu.memory_space<vmem>>, %arg5: memref<1x8x8xf32, #tpu.memory_space<vmem>>, %arg6: memref<1x8x8xf32, #tpu.memory_space<vmem>>, %arg7: memref<8x1xf32, #tpu.memory_space<vmem>>, %arg8: memref<8x1xf32, #tpu.memory_space<vmem>>, %arg9: memref<8x8xf32, #tpu.memory_space<vmem>>) attributes {dimension_semantics = [#tpu.dimension_semantics<parallel>, #tpu.dimension_semantics<parallel>, #tpu.dimension_semantics<arbitrary>], iteration_bounds = array<i64: 8, 1, 1>, scalar_prefetch = 0 : i64, scratch_operands = 3 : i64, tpu.core_type = #tpu.core_type<tc>, window_params = [{transform_indices = @transform_0, window_bounds = array<i64: 1, 8, 8>}, {transform_indices = @transform_1, window_bounds = array<i64: 1, 8, 8>}, {transform_indices = @transform_2, window_bounds = array<i64: 1, 8, 8>}, {transform_indices = @transform_3, window_bounds = array<i64: 1, 8, 8>}]} {
    %c0_i32 = arith.constant 0 : i32
    %0 = arith.cmpi eq, %arg2, %c0_i32 : i32
    %1 = arith.extui %0 : i1 to i32
    %c0_i32_0 = arith.constant 0 : i32
    %2 = arith.cmpi ne, %1, %c0_i32_0 : i32
    scf.if %2 {
      %cst_27 = arith.constant -2.38197633E+38 : f32
      %37 = vector.broadcast %cst_27 : f32 to vector<8x1xf32>
      %c0_28 = arith.constant 0 : index
      %c0_29 = arith.constant 0 : index
      %38 = vector.load %arg7[%c0_28, %c0_29] : memref<8x1xf32, #tpu.memory_space<vmem>>, vector<8x1xf32>
      tpu.vector_store %arg7[%c0_28, %c0_29], %37 {strides = array<i32>} : memref<8x1xf32, #tpu.memory_space<vmem>>, vector<8x1xf32>,
      %cst_30 = arith.constant 0.000000e+00 : f32
      %39 = vector.broadcast %cst_30 : f32 to vector<8x1xf32>
      %c0_31 = arith.constant 0 : index
      %c0_32 = arith.constant 0 : index
      %40 = vector.load %arg8[%c0_31, %c0_32] : memref<8x1xf32, #tpu.memory_space<vmem>>, vector<8x1xf32>
      tpu.vector_store %arg8[%c0_31, %c0_32], %39 {strides = array<i32>} : memref<8x1xf32, #tpu.memory_space<vmem>>, vector<8x1xf32>,
      %cst_33 = arith.constant 0.000000e+00 : f32
      %41 = vector.broadcast %cst_33 : f32 to vector<8x8xf32>
      %c0_34 = arith.constant 0 : index
      %c0_35 = arith.constant 0 : index
      %42 = vector.load %arg9[%c0_34, %c0_35] : memref<8x8xf32, #tpu.memory_space<vmem>>, vector<8x8xf32>
      tpu.vector_store %arg9[%c0_34, %c0_35], %41 {strides = array<i32>} : memref<8x8xf32, #tpu.memory_space<vmem>>, vector<8x8xf32>,
    } else {
    }
    %c0 = arith.constant 0 : index
    %c0_1 = arith.constant 0 : index
    %c0_2 = arith.constant 0 : index
    %3 = vector.load %arg3[%c0, %c0_1, %c0_2] : memref<1x8x8xf32, #tpu.memory_space<vmem>>, vector<1x8x8xf32>
    %4 = vector.shape_cast %3 : vector<1x8x8xf32> to vector<8x8xf32>
    %cst = arith.constant 0.353553385 : f32
    %5 = vector.broadcast %cst : f32 to vector<8x8xf32>
    %6 = arith.mulf %4, %5 : vector<8x8xf32>
    %c0_3 = arith.constant 0 : index
    %c0_4 = arith.constant 0 : index
    %c0_5 = arith.constant 0 : index
    %7 = vector.load %arg4[%c0_3, %c0_4, %c0_5] : memref<1x8x8xf32, #tpu.memory_space<vmem>>, vector<1x8x8xf32>
    %8 = vector.shape_cast %7 : vector<1x8x8xf32> to vector<8x8xf32>
    %c0_6 = arith.constant 0 : index
    %c0_7 = arith.constant 0 : index
    %c0_8 = arith.constant 0 : index
    %9 = vector.load %arg5[%c0_6, %c0_7, %c0_8] : memref<1x8x8xf32, #tpu.memory_space<vmem>>, vector<1x8x8xf32>
    %10 = vector.shape_cast %9 : vector<1x8x8xf32> to vector<8x8xf32>
    %cst_9 = arith.constant dense<0.000000e+00> : vector<8x8xf32>
    %11 = tpu.matmul %6, %8, %cst_9 {dimension_numbers = #tpu.dot_dimension_numbers<[1], [1], [0], [0], [0, 0, 1, 0], [], []>} : vector<8x8xf32>, vector<8x8xf32>, vector<8x8xf32> -> vector<8x8xf32>
    %c0_10 = arith.constant 0 : index
    %c0_11 = arith.constant 0 : index
    %12 = vector.load %arg7[%c0_10, %c0_11] : memref<8x1xf32, #tpu.memory_space<vmem>>, vector<8x1xf32>
    %cst_12 = arith.constant dense<0xFF800000> : vector<8xf32>
    %13 = vector.multi_reduction <maximumf>, %11, %cst_12 [1] : vector<8x8xf32> to vector<8xf32>
    %14 = vector.shape_cast %13 : vector<8xf32> to vector<8x1xf32>
    %15 = arith.maximumf %12, %14 : vector<8x1xf32>
    %16 = arith.subf %12, %15 : vector<8x1xf32>
    %17 = math.exp %16 : vector<8x1xf32>
    %18 = vector.broadcast %15 : vector<8x1xf32> to vector<8x8xf32>
    %19 = arith.subf %11, %18 : vector<8x8xf32>
    %20 = math.exp %19 : vector<8x8xf32>
    %c0_13 = arith.constant 0 : index
    %c0_14 = arith.constant 0 : index
    %21 = vector.load %arg8[%c0_13, %c0_14] : memref<8x1xf32, #tpu.memory_space<vmem>>, vector<8x1xf32>
    %22 = arith.mulf %17, %21 : vector<8x1xf32>
    %cst_15 = arith.constant dense<0.000000e+00> : vector<8xf32>
    %23 = vector.multi_reduction <add>, %20, %cst_15 [1] : vector<8x8xf32> to vector<8xf32>
    %24 = vector.shape_cast %23 : vector<8xf32> to vector<8x1xf32>
    %25 = arith.addf %22, %24 : vector<8x1xf32>
    %c0_16 = arith.constant 0 : index
    %c0_17 = arith.constant 0 : index
    %26 = vector.load %arg8[%c0_16, %c0_17] : memref<8x1xf32, #tpu.memory_space<vmem>>, vector<8x1xf32>
    tpu.vector_store %arg8[%c0_16, %c0_17], %25 {strides = array<i32>} : memref<8x1xf32, #tpu.memory_space<vmem>>, vector<8x1xf32>,
    %c0_18 = arith.constant 0 : index
    %c0_19 = arith.constant 0 : index
    %27 = vector.load %arg9[%c0_18, %c0_19] : memref<8x8xf32, #tpu.memory_space<vmem>>, vector<8x8xf32>
    %28 = vector.broadcast %17 : vector<8x1xf32> to vector<8x8xf32>
    %29 = arith.mulf %28, %27 : vector<8x8xf32>
    %cst_20 = arith.constant dense<0.000000e+00> : vector<8x8xf32>
    %30 = tpu.matmul %20, %10, %cst_20 {dimension_numbers = #tpu.dot_dimension_numbers<[1], [0], [0], [1], [0, 0, 1, 1], [], []>} : vector<8x8xf32>, vector<8x8xf32>, vector<8x8xf32> -> vector<8x8xf32>
    %31 = arith.addf %29, %30 : vector<8x8xf32>
    %c0_21 = arith.constant 0 : index
    %c0_22 = arith.constant 0 : index
    %32 = vector.load %arg9[%c0_21, %c0_22] : memref<8x8xf32, #tpu.memory_space<vmem>>, vector<8x8xf32>
    tpu.vector_store %arg9[%c0_21, %c0_22], %31 {strides = array<i32>} : memref<8x8xf32, #tpu.memory_space<vmem>>, vector<8x8xf32>,
    %c0_23 = arith.constant 0 : index
    %c0_24 = arith.constant 0 : index
    %33 = vector.load %arg7[%c0_23, %c0_24] : memref<8x1xf32, #tpu.memory_space<vmem>>, vector<8x1xf32>
    tpu.vector_store %arg7[%c0_23, %c0_24], %15 {strides = array<i32>} : memref<8x1xf32, #tpu.memory_space<vmem>>, vector<8x1xf32>,
    %c0_i32_25 = arith.constant 0 : i32
    %34 = arith.cmpi eq, %arg2, %c0_i32_25 : i32
    %35 = arith.extui %34 : i1 to i32
    %c0_i32_26 = arith.constant 0 : i32
    %36 = arith.cmpi ne, %35, %c0_i32_26 : i32
    scf.if %36 {
      %c0_27 = arith.constant 0 : index
      %c0_28 = arith.constant 0 : index
      %37 = vector.load %arg8[%c0_27, %c0_28] : memref<8x1xf32, #tpu.memory_space<vmem>>, vector<8x1xf32>
      %38 = tpu.reciprocal %37 {approx = true} : vector<8x1xf32> -> vector<8x1xf32>
      %c0_29 = arith.constant 0 : index
      %c0_30 = arith.constant 0 : index
      %39 = vector.load %arg9[%c0_29, %c0_30] : memref<8x8xf32, #tpu.memory_space<vmem>>, vector<8x8xf32>
      %40 = vector.broadcast %38 : vector<8x1xf32> to vector<8x8xf32>
      %41 = arith.mulf %39, %40 : vector<8x8xf32>
      %c0_31 = arith.constant 0 : index
      %c0_32 = arith.constant 0 : index
      %c0_33 = arith.constant 0 : index
      %42 = vector.load %arg6[%c0_31, %c0_32, %c0_33] : memref<1x8x8xf32, #tpu.memory_space<vmem>>, vector<1x8x8xf32>
      %43 = vector.shape_cast %42 : vector<1x8x8xf32> to vector<8x8xf32>
      %44 = vector.shape_cast %41 : vector<8x8xf32> to vector<1x8x8xf32>
      tpu.vector_store %arg6[%c0_31, %c0_32, %c0_33], %44 {strides = array<i32>} : memref<1x8x8xf32, #tpu.memory_space<vmem>>, vector<1x8x8xf32>,
    } else {
    }
    return
  }
  func.func @transform_0(%arg0: i32, %arg1: i32, %arg2: i32) -> (i32, i32, i32) {
    %c0_i32 = arith.constant 0 : i32
    %c0_i32_0 = arith.constant 0 : i32
    return %arg0, %arg1, %c0_i32 : i32, i32, i32
  }
  func.func @transform_1(%arg0: i32, %arg1: i32, %arg2: i32) -> (i32, i32, i32) {
    %c0_i32 = arith.constant 0 : i32
    %c0_i32_0 = arith.constant 0 : i32
    return %arg0, %arg2, %c0_i32 : i32, i32, i32
  }
  func.func @transform_2(%arg0: i32, %arg1: i32, %arg2: i32) -> (i32, i32, i32) {
    %c0_i32 = arith.constant 0 : i32
    %c0_i32_0 = arith.constant 0 : i32
    return %arg0, %arg2, %c0_i32 : i32, i32, i32
  }
  func.func @transform_3(%arg0: i32, %arg1: i32, %arg2: i32) -> (i32, i32, i32) {
    %c0_i32 = arith.constant 0 : i32
    %c0_i32_0 = arith.constant 0 : i32
    return %arg0, %arg1, %c0_i32 : i32, i32, i32
  }
}

</mosaic_0001>

<llo_original>
// kernel: tpu_custom_call.1
$region0: #{tpu_custom_call.1}
  #allocation0 [shape = 'u32[]', space=smem, size = 0x4, offset = 0x4, fixed_abs, tag = 'smem constant byte address 0x4 - core index']
  #allocation1 [shape = 'u32[144,128]{1,0:T(1,128)}', space=vmem, size = 0x12000, scoped, tag = 'internal scratch']
  #allocation2 [shape = 'f32[8,1]{1,0:T(8,128)}', space=vmem, size = 0x1000, scoped, tag = 'scratch operand']
  #allocation3 [shape = 'f32[8,1]{1,0:T(8,128)}', space=vmem, size = 0x1000, scoped, tag = 'scratch operand']
  #allocation4 [shape = 'f32[8,8]{1,0:T(8,128)}', space=vmem, size = 0x1000, scoped, tag = 'scratch operand']
  %s0 = inlined_call_operand.hbm [shape: f32[8,8,8], index: 0, kind: input, shape index: {}]
  %s1 = inlined_call_operand.hbm [shape: f32[8,8,8], index: 1, kind: input, shape index: {}]
  %s2 = inlined_call_operand.hbm [shape: f32[8,8,8], index: 2, kind: input, shape index: {}]
  %s3 = inlined_call_operand.hbm [shape: f32[8,8,8], index: 3, kind: output, shape index: {}]
  %s4 = sld [smem:[#allocation0]]
  $region65: #{tpu_custom_call.1} parent=0
    _
  %s6 = ssub.s32 1, %s4
  %s7 = scalar_select 0, %s6, %s4
  $region1: #{tpu_custom_call.1} parent=0
    #allocation5 [shape = 'u8[8192]{0}', space=vmem, size = 0x2000, scoped, tag = 'input window, operand 0']
    #allocation6 [shape = 's32[2]{0}', space=sflag, size = 0x8, scoped, tag = 'scoped memory for tpu_custom_call.1']
    #allocation7 [shape = 's32[2]{0}', space=sflag, size = 0x8, scoped, tag = 'scoped memory for tpu_custom_call.1']
    #allocation8 [shape = 'u8[8192]{0}', space=vmem, size = 0x2000, scoped, tag = 'input window, operand 1']
    #allocation9 [shape = 's32[2]{0}', space=sflag, size = 0x8, scoped, tag = 'scoped memory for tpu_custom_call.1']
    #allocation10 [shape = 'u8[8192]{0}', space=vmem, size = 0x2000, scoped, tag = 'input window, operand 2']
    #allocation11 [shape = 'u8[8192]{0}', space=vmem, size = 0x2000, scoped, tag = 'output window, operand 0']
    %8 = vsyncpa [#allocation6], 0
    %s9 = scalar_lea.sflag [#allocation6], 1
    %10 = vsyncpa %s9, 0
    %11 = vsyncpa [#allocation9], 0
    %s12 = scalar_lea.sflag [#allocation9], 1
    %13 = vsyncpa %s12, 0
    %14 = vsyncpa [#allocation7], 0
    %s15 = scalar_lea.sflag [#allocation7], 1
    %16 = vsyncpa %s15, 0
    loop: start=0, step=1, limit=10
    $region2: #{tpu_custom_call.1} parent=1 // loop_pre_header
      _
    $region3: #{tpu_custom_call.1} parent=1 // loop_header
      %s18 = sphi 0, %s22
      %p19 = scmp.ge.s32.totalorder %s18, 10
      %s25 = sphi 0, %s44
      %s26 = sphi 0, %s40
      %s27 = sphi 0, %s36
      %s28 = sphi 0, %s25
      %s29 = sphi 0, %s26
      %s30 = sphi 0, %s27
      %s31 = sphi 0, %s28
      %s32 = sphi 0, %s29
      %s33 = sphi 0, %s30
      %s49 = sphi 0, %s51
      %s52 = sphi 0, %s49
      %s53 = sphi 0, %s52
      %s69 = sphi 0, %s53
      %s77 = sphi 0, %s79
      %s80 = sphi 0, %s77
      %s81 = sphi 0, %s80
      %s97 = sphi 0, %s81
      %s105 = sphi 0, %s107
      %s108 = sphi 0, %s105
      %s109 = sphi 0, %s108
      %s125 = sphi 0, %s109
      %s133 = sphi 0, %s135
      %s136 = sphi 0, %s133
      %s137 = sphi 0, %s136
      %s153 = sphi 0, %s137
    $region4: #{tpu_custom_call.1} parent=1 // loop_header_branch
      %21 = sbr.rel (%p19) target = $region8
    $region5: #{tpu_custom_call.1} parent=1 // loop_body
      %s23 = ssub.s32 %s18, 1
      %s24 = ssub.s32 %s18, 2
      %s34 = sadd.s32 1, %s27
      %p35 = scmp.ge.s32.totalorder %s34, 1
      %s36 = scalar_select %p35, 0, %s34
      %s37 = sadd.s32 1, %s26
      %s38 = scalar_select %p35, %s37, %s26
      %p39 = scmp.ge.s32.totalorder %s38, 1
      %s40 = scalar_select %p39, 0, %s38
      %s41 = sadd.s32 1, %s25
      %s42 = scalar_select %p39, %s41, %s25
      %p43 = scmp.ge.s32.totalorder %s42, 8
      %s44 = scalar_select %p43, 0, %s42
      %s45 = ssub.s32 %s25, %s44
      %s46 = ssub.s32 %s26, %s40
      %s47 = sor.u32 %s45, %s46
      %p48 = scmp.eq.s32.totalorder %s47, 0
      %s50 = sadd.s32 %s49, 1
      %s51 = scalar_select %p48, %s49, %s50
      %p54 = pneg %p48
      %p55 = scmp.eq.s32.totalorder %s18, 7
      %p56 = por %p54, %p55
      %p57 = scmp.ne.s32.totalorder %s49, %s52
      %p58 = scmp.eq.s32.totalorder %s18, 0
      %p59 = por %p57, %p58
      %p60 = scmp.ne.s32.totalorder %s49, %s52
      %p61 = scmp.eq.s32.totalorder %s23, 7
      %p62 = por %p60, %p61
      %p63 = scmp.ne.s32.totalorder %s52, %s53
      %p64 = scmp.eq.s32.totalorder %s23, 0
      %p65 = por %p63, %p64
      %p66 = scmp.ne.s32.totalorder %s52, %s53
      %p67 = scmp.eq.s32.totalorder %s24, 7
      %p68 = por %p66, %p67
      %p70 = scmp.ne.s32.totalorder %s53, %s69
      %p71 = scmp.eq.s32.totalorder %s24, 0
      %p72 = por %p70, %p71
      %s73 = ssub.s32 %s25, %s44
      %s74 = ssub.s32 %s27, %s36
      %s75 = sor.u32 %s73, %s74
      %p76 = scmp.eq.s32.totalorder %s75, 0
      %s78 = sadd.s32 %s77, 1
      %s79 = scalar_select %p76, %s77, %s78
      %p82 = pneg %p76
      %p83 = scmp.eq.s32.totalorder %s18, 7
      %p84 = por %p82, %p83
      %p85 = scmp.ne.s32.totalorder %s77, %s80
      %p86 = scmp.eq.s32.totalorder %s18, 0
      %p87 = por %p85, %p86
      %p88 = scmp.ne.s32.totalorder %s77, %s80
      %p89 = scmp.eq.s32.totalorder %s23, 7
      %p90 = por %p88, %p89
      %p91 = scmp.ne.s32.totalorder %s80, %s81
      %p92 = scmp.eq.s32.totalorder %s23, 0
      %p93 = por %p91, %p92
      %p94 = scmp.ne.s32.totalorder %s80, %s81
      %p95 = scmp.eq.s32.totalorder %s24, 7
      %p96 = por %p94, %p95
      %p98 = scmp.ne.s32.totalorder %s81, %s97
      %p99 = scmp.eq.s32.totalorder %s24, 0
      %p100 = por %p98, %p99
      %s101 = ssub.s32 %s25, %s44
      %s102 = ssub.s32 %s27, %s36
      %s103 = sor.u32 %s101, %s102
      %p104 = scmp.eq.s32.totalorder %s103, 0
      %s106 = sadd.s32 %s105, 1
      %s107 = scalar_select %p104, %s105, %s106
      %p110 = pneg %p104
      %p111 = scmp.eq.s32.totalorder %s18, 7
      %p112 = por %p110, %p111
      %p113 = scmp.ne.s32.totalorder %s105, %s108
      %p114 = scmp.eq.s32.totalorder %s18, 0
      %p115 = por %p113, %p114
      %p116 = scmp.ne.s32.totalorder %s105, %s108
      %p117 = scmp.eq.s32.totalorder %s23, 7
      %p118 = por %p116, %p117
      %p119 = scmp.ne.s32.totalorder %s108, %s109
      %p120 = scmp.eq.s32.totalorder %s23, 0
      %p121 = por %p119, %p120
      %p122 = scmp.ne.s32.totalorder %s108, %s109
      %p123 = scmp.eq.s32.totalorder %s24, 7
      %p124 = por %p122, %p123
      %p126 = scmp.ne.s32.totalorder %s109, %s125
      %p127 = scmp.eq.s32.totalorder %s24, 0
      %p128 = por %p126, %p127
      %s129 = ssub.s32 %s25, %s44
      %s130 = ssub.s32 %s26, %s40
      %s131 = sor.u32 %s129, %s130
      %p132 = scmp.eq.s32.totalorder %s131, 0
      %s134 = sadd.s32 %s133, 1
      %s135 = scalar_select %p132, %s133, %s134
      %p138 = pneg %p132
      %p139 = scmp.eq.s32.totalorder %s18, 7
      %p140 = por %p138, %p139
      %p141 = scmp.ne.s32.totalorder %s133, %s136
      %p142 = scmp.eq.s32.totalorder %s18, 0
      %p143 = por %p141, %p142
      %p144 = scmp.ne.s32.totalorder %s133, %s136
      %p145 = scmp.eq.s32.totalorder %s23, 7
      %p146 = por %p144, %p145
      %p147 = scmp.ne.s32.totalorder %s136, %s137
      %p148 = scmp.eq.s32.totalorder %s23, 0
      %p149 = por %p147, %p148
      %p150 = scmp.ne.s32.totalorder %s136, %s137
      %p151 = scmp.eq.s32.totalorder %s24, 7
      %p152 = por %p150, %p151
      %p154 = scmp.ne.s32.totalorder %s137, %s153
      %p155 = scmp.eq.s32.totalorder %s24, 0
      %p156 = por %p154, %p155
      %p157 = scmp.le.s32.totalorder 1, %s18
      %p158 = scmp.lt.s32.totalorder %s18, 9
      %p159 = pnand %p157, %p158
      %p160 = pneg %p159
      // Predicated region
      $region9: #{tpu_custom_call.1} parent=5 // pred_check
        _
      $region10: #{tpu_custom_call.1} parent=5 // pred_check_branch
        %162 = sbr.rel (%p159) target = $region12
      $region11: #{tpu_custom_call.1} parent=5 // pred_region
        %s163 = ssub.s32 %s18, 1
      $region12: #{tpu_custom_call.1} parent=5 // pred_fallthru
        _
      %p164 = scmp.lt.s32.totalorder %s18, 8
      // Predicated region
      $region13: #{tpu_custom_call.1} parent=5 // pred_check
        %p165 = pneg %p164
      $region14: #{tpu_custom_call.1} parent=5 // pred_check_branch
        %167 = sbr.rel (%p165) target = $region16
      $region15: #{tpu_custom_call.1} parent=5 // pred_region
        // Predicated region
        $region17: #{tpu_custom_call.1} parent=15 // pred_check
          %p168 = pneg %p59
        $region18: #{tpu_custom_call.1} parent=15 // pred_check_branch
          %170 = sbr.rel (%p168) target = $region20
        $region19: #{tpu_custom_call.1} parent=15 // pred_region
          %s171 = sand.u32 %s49, 1
          %s172 = scalar_lea.sflag [#allocation6], %s171
          %s173 = sand.u32 %s49, 1
          %s174 = smul.addr %s173, 8
          %s175 = scalar_lea.vmem [#allocation5], %s174
          %s177 = ssub.s32 128, 128
          %178 = vsyncadd %s172, %s177
          %s179 = sadd.s32 %s26, %s25
          %s180 = smul.addr %s179, 128
          %s181 = scalar_lea.hbm %s0, %s180
          %s183 = sshll.u32 %s175, 4
          %s184 = int_to_ptr.vmem [resolvable:$true] %s183
          %186 = dma.hbm_to_vmem [thread:$0]  %s181, 128, %s184, %s172
        $region20: #{tpu_custom_call.1} parent=15 // pred_fallthru
          _
        // Predicated region
        $region21: #{tpu_custom_call.1} parent=15 // pred_check
          %p187 = pneg %p87
        $region22: #{tpu_custom_call.1} parent=15 // pred_check_branch
          %189 = sbr.rel (%p187) target = $region24
        $region23: #{tpu_custom_call.1} parent=15 // pred_region
          %s190 = sand.u32 %s18, 1
          %s191 = scalar_lea.sflag [#allocation9], %s190
          %s192 = sand.u32 %s77, 1
          %s193 = smul.addr %s192, 8
          %s194 = scalar_lea.vmem [#allocation8], %s193
          %s196 = ssub.s32 128, 128
          %197 = vsyncadd %s191, %s196
          %s198 = sadd.s32 %s27, %s25
          %s199 = smul.addr %s198, 128
          %s200 = scalar_lea.hbm %s1, %s199
          %s202 = sshll.u32 %s194, 4
          %s203 = int_to_ptr.vmem [resolvable:$true] %s202
          %205 = dma.hbm_to_vmem [thread:$0]  %s200, 128, %s203, %s191
        $region24: #{tpu_custom_call.1} parent=15 // pred_fallthru
          _
        // Predicated region
        $region25: #{tpu_custom_call.1} parent=15 // pred_check
          %p206 = pneg %p115
        $region26: #{tpu_custom_call.1} parent=15 // pred_check_branch
          %208 = sbr.rel (%p206) target = $region28
        $region27: #{tpu_custom_call.1} parent=15 // pred_region
          %s209 = sand.u32 %s18, 1
          %s210 = scalar_lea.sflag [#allocation9], %s209
          %s211 = sand.u32 %s105, 1
          %s212 = smul.addr %s211, 8
          %s213 = scalar_lea.vmem [#allocation10], %s212
          %s215 = ssub.s32 128, 128
          %216 = vsyncadd %s210, %s215
          %s217 = sadd.s32 %s27, %s25
          %s218 = smul.addr %s217, 128
          %s219 = scalar_lea.hbm %s2, %s218
          %s221 = sshll.u32 %s213, 4
          %s222 = int_to_ptr.vmem [resolvable:$true] %s221
          %224 = dma.hbm_to_vmem [thread:$0]  %s219, 128, %s222, %s210
        $region28: #{tpu_custom_call.1} parent=15 // pred_fallthru
          _
      $region16: #{tpu_custom_call.1} parent=5 // pred_fallthru
        _
      %p225 = scmp.le.s32.totalorder 1, %s18
      %p226 = scmp.lt.s32.totalorder %s18, 9
      %p227 = pnand %p225, %p226
      %p228 = pneg %p227
      // Predicated region
      $region29: #{tpu_custom_call.1} parent=5 // pred_check
        _
      $region30: #{tpu_custom_call.1} parent=5 // pred_check_branch
        %230 = sbr.rel (%p227) target = $region32
      $region31: #{tpu_custom_call.1} parent=5 // pred_region
        %s231 = ssub.s32 %s18, 1
        %s232 = sand.u32 %s52, 1
        %s233 = scalar_lea.sflag [#allocation6], %s232
        %s234 = sand.u32 %s52, 1
        %s235 = smul.addr %s234, 8
        %s236 = scalar_lea.vmem [#allocation5], %s235
        // Predicated region
        $region33: #{tpu_custom_call.1} parent=31 // pred_check
          %p237 = pneg %p65
        $region34: #{tpu_custom_call.1} parent=31 // pred_check_branch
          %239 = sbr.rel (%p237) target = $region36
        $region35: #{tpu_custom_call.1} parent=31 // pred_region
          %240 = dma.done %s233, 128
        $region36: #{tpu_custom_call.1} parent=31 // pred_fallthru
          _
        %s241 = sand.u32 %s23, 1
        %s242 = scalar_lea.sflag [#allocation9], %s241
        %s243 = sand.u32 %s80, 1
        %s244 = smul.addr %s243, 8
        %s245 = scalar_lea.vmem [#allocation8], %s244
        // Predicated region
        $region37: #{tpu_custom_call.1} parent=31 // pred_check
          %p246 = pneg %p93
        $region38: #{tpu_custom_call.1} parent=31 // pred_check_branch
          %248 = sbr.rel (%p246) target = $region40
        $region39: #{tpu_custom_call.1} parent=31 // pred_region
          %249 = dma.done %s242, 128
        $region40: #{tpu_custom_call.1} parent=31 // pred_fallthru
          _
        %s250 = sand.u32 %s23, 1
        %s251 = scalar_lea.sflag [#allocation9], %s250
        %s252 = sand.u32 %s108, 1
        %s253 = smul.addr %s252, 8
        %s254 = scalar_lea.vmem [#allocation10], %s253
        // Predicated region
        $region41: #{tpu_custom_call.1} parent=31 // pred_check
          %p255 = pneg %p121
        $region42: #{tpu_custom_call.1} parent=31 // pred_check_branch
          %257 = sbr.rel (%p255) target = $region44
        $region43: #{tpu_custom_call.1} parent=31 // pred_region
          %258 = dma.done %s251, 128
        $region44: #{tpu_custom_call.1} parent=31 // pred_fallthru
          _
        %s259 = sand.u32 %s52, 1
        %s260 = scalar_lea.sflag [#allocation6], %s259
        %s261 = sand.u32 %s52, 1
        %s262 = smul.addr %s261, 8
        %s263 = scalar_lea.vmem [#allocation5], %s262
        %p264 = pneg %p65
        %p265 = pneg %p62
        %s266 = sand.u32 %s23, 1
        %s267 = scalar_lea.sflag [#allocation9], %s266
        %s268 = sand.u32 %s80, 1
        %s269 = smul.addr %s268, 8
        %s270 = scalar_lea.vmem [#allocation8], %s269
        %p271 = pneg %p93
        %p272 = pneg %p90
        %s273 = sand.u32 %s23, 1
        %s274 = scalar_lea.sflag [#allocation9], %s273
        %s275 = sand.u32 %s108, 1
        %s276 = smul.addr %s275, 8
        %s277 = scalar_lea.vmem [#allocation10], %s276
        %p278 = pneg %p121
        %p279 = pneg %p118
        %p280 = pneg %p149
        %p281 = pneg %p146
        %s282 = sand.u32 %s136, 1
        %s283 = scalar_lea.sflag [#allocation7], %s282
        %s284 = sand.u32 %s136, 1
        %s285 = smul.addr %s284, 8
        %s286 = scalar_lea.vmem [#allocation11], %s285
        %p287 = scmp.eq.s32.totalorder %s30, 0
        // Predicated region
        $region45: #{tpu_custom_call.1} parent=31 // pred_check
          %p288 = pneg %p287
        $region46: #{tpu_custom_call.1} parent=31 // pred_check_branch
          %290 = sbr.rel (%p288) target = $region48
        $region47: #{tpu_custom_call.1} parent=31 // pred_region
          %vm291 = vcmask 7168
          %292 = vst.msk [vmem:[#allocation2] sm:$0xff] %vm291, -2.3819763e+38
          %293 = vst.msk [vmem:[#allocation3] sm:$0xff] %vm291, 0.0
          %vm294 = vcmask 64512
          %295 = vst.msk [vmem:[#allocation4] sm:$0xff] %vm294, 0.0
        $region48: #{tpu_custom_call.1} parent=31 // pred_fallthru
          _
        %v296 = vld [vmem:[%s236] sm:$0xff]
        %v297 = vmul.f32 %v296, 0.35355338
        %v298 = vld [vmem:[%s245] sm:$0xff]
        %v299 = vld [vmem:[%s254] sm:$0xff]
        %vm300 = vcmask 64512
        %v302 = vsel %vm300, %v297, 0
        %v305 = vsel %vm300, %v298, 0
        %307 = vmatprep.subr.mxu0 0.0
        %308 = vmatpush1.xpose.msra.mxu0 0.0
        %309 = vmatprep.subr.mxu0 0.0
        %310 = vmatpush1.xpose.msra.mxu0 0.0
        %311 = vmatprep.subr.mxu0 0.0
        %312 = vmatpush1.xpose.msra.mxu0 0.0
        %313 = vmatprep.subr.mxu0 0.0
        %314 = vmatpush1.xpose.msra.mxu0 0.0
        %315 = vmatprep.subr.mxu0 0.0
        %316 = vmatpush1.xpose.msra.mxu0 0.0
        %317 = vmatprep.subr.mxu0 0.0
        %318 = vmatpush1.xpose.msra.mxu0 0.0
        %319 = vmatprep.subr.mxu0 0.0
        %320 = vmatpush1.xpose.msra.mxu0 0.0
        %321 = vmatprep.subr.mxu0 0.0
        %322 = vmatpush1.xpose.msra.mxu0 0.0
        %323 = vmatprep.subr.mxu0 0.0
        %324 = vmatpush1.xpose.msra.mxu0 0.0
        %325 = vmatprep.subr.mxu0 0.0
        %326 = vmatpush1.xpose.msra.mxu0 0.0
        %327 = vmatprep.subr.mxu0 0.0
        %328 = vmatpush1.xpose.msra.mxu0 0.0
        %329 = vmatprep.subr.mxu0 0.0
        %330 = vmatpush1.xpose.msra.mxu0 0.0
        %331 = vmatprep.subr.mxu0 0.0
        %332 = vmatpush1.xpose.msra.mxu0 0.0
        %333 = vmatprep.subr.mxu0 0.0
        %334 = vmatpush1.xpose.msra.mxu0 0.0
        %335 = vmatprep.subr.mxu0 0.0
        %336 = vmatpush1.xpose.msra.mxu0 0.0
        %337 = vmatprep.subr.mxu0 0.0
        %338 = vmatpush1.xpose.msra.mxu0 %v305
        %339 = vmatprep.subr.mxu0 0.0
        %340 = vmatpush2.xpose.msra.mxu0 0.0
        %341 = vmatprep.subr.mxu0 0.0
        %342 = vmatpush2.xpose.msra.mxu0 0.0
        %343 = vmatprep.subr.mxu0 0.0
        %344 = vmatpush2.xpose.msra.mxu0 0.0
        %345 = vmatprep.subr.mxu0 0.0
        %346 = vmatpush2.xpose.msra.mxu0 0.0
        %347 = vmatprep.subr.mxu0 0.0
        %348 = vmatpush2.xpose.msra.mxu0 0.0
        %349 = vmatprep.subr.mxu0 0.0
        %350 = vmatpush2.xpose.msra.mxu0 0.0
        %351 = vmatprep.subr.mxu0 0.0
        %352 = vmatpush2.xpose.msra.mxu0 0.0
        %353 = vmatprep.subr.mxu0 0.0
        %354 = vmatpush2.xpose.msra.mxu0 0.0
        %355 = vmatprep.subr.mxu0 0.0
        %356 = vmatpush2.xpose.msra.mxu0 0.0
        %357 = vmatprep.subr.mxu0 0.0
        %358 = vmatpush2.xpose.msra.mxu0 0.0
        %359 = vmatprep.subr.mxu0 0.0
        %360 = vmatpush2.xpose.msra.mxu0 0.0
        %361 = vmatprep.subr.mxu0 0.0
        %362 = vmatpush2.xpose.msra.mxu0 0.0
        %363 = vmatprep.subr.mxu0 0.0
        %364 = vmatpush2.xpose.msra.mxu0 0.0
        %365 = vmatprep.subr.mxu0 0.0
        %366 = vmatpush2.xpose.msra.mxu0 0.0
        %367 = vmatprep.subr.mxu0 0.0
        %368 = vmatpush2.xpose.msra.mxu0 0.0
        %369 = vmatprep.subr.mxu0 0.0
        %370 = vmatpush2.xpose.msra.mxu0 0.0
        %371 = vmatprep.mubr.f32.mxu0 0.0
        %372 = vmatmul.mubr.f32.gmra.mxu0 %v302
        %v373 = vpop.f32.mrf.mxu0
        %v374 = vadd.f32 0.0, %v373
        %v375 = vpop.f32.mrf.mxu0
        %376 = vdwg.mxu0
        %v377 = vld [vmem:[#allocation2] sm:$0xff]
        %v378 = vsel %vm300, %v374, -inf
        %379 = vmax.xlane.f32.xlu0 %v378
        %v380 = vpop.xlane.xlu0 %379
        %v381 = vmax.f32 %v377, %v380
        %v382 = vsub.f32 %v377, %v381
        %v383 = vmul.f32 %v382, 1.442695
        %v384 = vpow.pop %v383
        %386 = vset.pattern.permute.xlu0 0
        %387 = vperm.xlu0 %386, %v381
        %v388 = vpop.permute.xlu0 %387
        %v390 = vsub.f32 %v374, %v388
        %v391 = vmul.f32 %v390, 1.442695
        %v392 = vpow.pop %v391
        %v393 = vld [vmem:[#allocation3] sm:$0xff]
        %v394 = vmul.f32 %v384, %v393
        %v395 = vsel %vm300, %v392, 0.0
        %396 = vadd.xlane.f32.xlu0 %v395
        %v397 = vpop.xlane.xlu0 %396
        %v398 = vadd.f32 %v394, %v397
        %vm399 = vcmask 7168
        %400 = vst.msk [vmem:[#allocation3] sm:$0xff] %vm399, %v398
        %v401 = vld [vmem:[#allocation4] sm:$0xff]
        %403 = vset.pattern.permute.xlu0 0
        %404 = vperm.xlu0 %403, %v384
        %v405 = vpop.permute.xlu0 %404
        %v407 = vmul.f32 %v405, %v401
        %v409 = vsel %vm300, %v392, 0
        %411 = vmatprep.subr.mxu0 0.0
        %412 = vmatpush1.msra.mxu0 0.0
        %413 = vmatprep.subr.mxu0 0.0
        %414 = vmatpush1.msra.mxu0 0.0
        %415 = vmatprep.subr.mxu0 0.0
        %416 = vmatpush1.msra.mxu0 0.0
        %417 = vmatprep.subr.mxu0 0.0
        %418 = vmatpush1.msra.mxu0 0.0
        %419 = vmatprep.subr.mxu0 0.0
        %420 = vmatpush1.msra.mxu0 0.0
        %421 = vmatprep.subr.mxu0 0.0
        %422 = vmatpush1.msra.mxu0 0.0
        %423 = vmatprep.subr.mxu0 0.0
        %424 = vmatpush1.msra.mxu0 0.0
        %425 = vmatprep.subr.mxu0 0.0
        %426 = vmatpush1.msra.mxu0 0.0
        %427 = vmatprep.subr.mxu0 0.0
        %428 = vmatpush1.msra.mxu0 0.0
        %429 = vmatprep.subr.mxu0 0.0
        %430 = vmatpush1.msra.mxu0 0.0
        %431 = vmatprep.subr.mxu0 0.0
        %432 = vmatpush1.msra.mxu0 0.0
        %433 = vmatprep.subr.mxu0 0.0
        %434 = vmatpush1.msra.mxu0 0.0
        %435 = vmatprep.subr.mxu0 0.0
        %436 = vmatpush1.msra.mxu0 0.0
        %437 = vmatprep.subr.mxu0 0.0
        %438 = vmatpush1.msra.mxu0 0.0
        %439 = vmatprep.subr.mxu0 0.0
        %440 = vmatpush1.msra.mxu0 0.0
        %441 = vmatprep.subr.mxu0 0.0
        %442 = vmatpush1.msra.mxu0 %v299
        %443 = vmatprep.subr.mxu0 0.0
        %444 = vmatpush2.msra.mxu0 0.0
        %445 = vmatprep.subr.mxu0 0.0
        %446 = vmatpush2.msra.mxu0 0.0
        %447 = vmatprep.subr.mxu0 0.0
        %448 = vmatpush2.msra.mxu0 0.0
        %449 = vmatprep.subr.mxu0 0.0
        %450 = vmatpush2.msra.mxu0 0.0
        %451 = vmatprep.subr.mxu0 0.0
        %452 = vmatpush2.msra.mxu0 0.0
        %453 = vmatprep.subr.mxu0 0.0
        %454 = vmatpush2.msra.mxu0 0.0
        %455 = vmatprep.subr.mxu0 0.0
        %456 = vmatpush2.msra.mxu0 0.0
        %457 = vmatprep.subr.mxu0 0.0
        %458 = vmatpush2.msra.mxu0 0.0
        %459 = vmatprep.subr.mxu0 0.0
        %460 = vmatpush2.msra.mxu0 0.0
        %461 = vmatprep.subr.mxu0 0.0
        %462 = vmatpush2.msra.mxu0 0.0
        %463 = vmatprep.subr.mxu0 0.0
        %464 = vmatpush2.msra.mxu0 0.0
        %465 = vmatprep.subr.mxu0 0.0
        %466 = vmatpush2.msra.mxu0 0.0
        %467 = vmatprep.subr.mxu0 0.0
        %468 = vmatpush2.msra.mxu0 0.0
        %469 = vmatprep.subr.mxu0 0.0
        %470 = vmatpush2.msra.mxu0 0.0
        %471 = vmatprep.subr.mxu0 0.0
        %472 = vmatpush2.msra.mxu0 0.0
        %473 = vmatprep.subr.mxu0 0.0
        %474 = vmatpush2.msra.mxu0 0.0
        %475 = vmatprep.mubr.f32.mxu0 0.0
        %476 = vmatmul.mubr.f32.gmra.mxu0 %v409
        %v477 = vpop.f32.mrf.mxu0
        %v478 = vadd.f32 0.0, %v477
        %v479 = vpop.f32.mrf.mxu0
        %480 = vdwg.mxu0
        %v481 = vadd.f32 %v407, %v478
        %482 = vst.msk [vmem:[#allocation4] sm:$0xff] %vm300, %v481
        %483 = vst.msk [vmem:[#allocation2] sm:$0xff] %vm399, %v381
        // Predicated region
        $region49: #{tpu_custom_call.1} parent=31 // pred_check
          %p484 = pneg %p287
        $region50: #{tpu_custom_call.1} parent=31 // pred_check_branch
          %486 = sbr.rel (%p484) target = $region52
        $region51: #{tpu_custom_call.1} parent=31 // pred_region
          %v487 = vld [vmem:[#allocation3] sm:$0xff]
          %v488 = vrcp.pop %v487
          %v489 = vld [vmem:[#allocation4] sm:$0xff]
          %491 = vset.pattern.permute.xlu0 0
          %492 = vperm.xlu0 %491, %v488
          %v493 = vpop.permute.xlu0 %492
          %v495 = vmul.f32 %v489, %v493
          %496 = vst.msk [vmem:[%s286] sm:$0xff] %vm300, %v495
        $region52: #{tpu_custom_call.1} parent=31 // pred_fallthru
          _
        %s497 = sand.u32 %s136, 1
        %s498 = scalar_lea.sflag [#allocation7], %s497
        %s499 = sand.u32 %s136, 1
        %s500 = smul.addr %s499, 8
        %s501 = scalar_lea.vmem [#allocation11], %s500
        // Predicated region
        $region53: #{tpu_custom_call.1} parent=31 // pred_check
          %p502 = pneg %p146
        $region54: #{tpu_custom_call.1} parent=31 // pred_check_branch
          %504 = sbr.rel (%p502) target = $region56
        $region55: #{tpu_custom_call.1} parent=31 // pred_region
          %s506 = ssub.s32 128, 128
          %507 = vsyncadd %s498, %s506
          %s508 = sadd.s32 %s29, %s28
          %s509 = smul.addr %s508, 128
          %s510 = scalar_lea.hbm %s3, %s509
          %s512 = sshll.u32 %s501, 4
          %s513 = int_to_ptr.vmem [resolvable:$true] %s512
          %515 = dma.vmem_to_hbm [thread:$0]  %s513, 128, %s510, %s498
        $region56: #{tpu_custom_call.1} parent=31 // pred_fallthru
          _
      $region32: #{tpu_custom_call.1} parent=5 // pred_fallthru
        _
      %p516 = scmp.le.s32.totalorder 2, %s18
      // Predicated region
      $region57: #{tpu_custom_call.1} parent=5 // pred_check
        %p517 = pneg %p516
      $region58: #{tpu_custom_call.1} parent=5 // pred_check_branch
        %519 = sbr.rel (%p517) target = $region60
      $region59: #{tpu_custom_call.1} parent=5 // pred_region
        %s520 = ssub.s32 %s18, 2
        // Predicated region
        $region61: #{tpu_custom_call.1} parent=59 // pred_check
          %p521 = pneg %p152
        $region62: #{tpu_custom_call.1} parent=59 // pred_check_branch
          %523 = sbr.rel (%p521) target = $region64
        $region63: #{tpu_custom_call.1} parent=59 // pred_region
          %s524 = sand.u32 %s137, 1
          %s525 = scalar_lea.sflag [#allocation7], %s524
          %s526 = sand.u32 %s137, 1
          %s527 = smul.addr %s526, 8
          %s528 = scalar_lea.vmem [#allocation11], %s527
          %529 = dma.done %s525, 128
        $region64: #{tpu_custom_call.1} parent=59 // pred_fallthru
          _
      $region60: #{tpu_custom_call.1} parent=5 // pred_fallthru
        _
    $region6: #{tpu_custom_call.1} parent=1 // loop_footer
      %s22 = sadd.s32 1, %s18
    $region7: #{tpu_custom_call.1} parent=1 // loop_footer_branch
      %17 = sbr.rel target = $region3
    $region8: #{tpu_custom_call.1} parent=1 // loop_exit
      _
    %530 = vsyncpa [#allocation6], 1
    %s531 = scalar_lea.sflag [#allocation6], 1
    %532 = vsyncpa %s531, 1
    %533 = vsyncpa [#allocation9], 1
    %s534 = scalar_lea.sflag [#allocation9], 1
    %535 = vsyncpa %s534, 1
    %536 = vsyncpa [#allocation7], 1
    %s537 = scalar_lea.sflag [#allocation7], 1
    %538 = vsyncpa %s537, 1

</llo_original>
